<compile_context>
chip_gen: v5e
topology: v5e:2x2
jax: 0.10.0
libtpu: 0.0.40
codegen_flags: <defaults>
</compile_context>

<pallas_src>
import functools

import jax
import jax.numpy as jnp
from jax.experimental import pallas as pl
from jax.experimental.pallas import tpu as pltpu

raw_text = ('We are about to study the idea of a computational process.\n'
            'Computational processes are abstract beings that inhabit computers.\n'
            'As they evolve, processes manipulate other abstract things called data.\n'
            'The evolution of a process is directed by a pattern of rules\n'
            'called a program. People create programs to direct processes. In effect,\n'
            'we conjure the spirits of the computer with our spells.').split()

VOCAB_SIZE = len(set(raw_text))   # 49
EMBED_DIM = 5
CONTEXT_SIZE = 4                  # 2 left + 2 right context words

LANE = 128
SUBLANE = 8
TB_MAX = 256
NEG_INF = -1e30


def _round_up(x, m):
    return ((x + m - 1) // m) * m


def cbow_kernel(idx_ref, m_ref, b_ref, o_ref):
    """One batch tile of CBOW forwards.

    idx_ref : VMEM (TB, CTX) int32       clamped context word ids
    m_ref   : VMEM (V_pad, V_pad) bf16   folded E @ W^T (padded rows/cols = 0)
    b_ref   : VMEM (1, V_pad) f32        bias; padded columns hold -1e30
    o_ref   : VMEM (TB, V_pad) f32       per-row log-probs (lane-dense store)
    """
    tb, ctx = idx_ref.shape
    vocab_pad = o_ref.shape[1]

    idx = idx_ref[...]                                                 # (TB, CTX)
    vocab_iota = jax.lax.broadcasted_iota(jnp.int32, (tb, vocab_pad), 1)

    # counts[b, v] = #{c : idx[b, c] == v}; duplicated context words are
    # counted, matching the reference embeds.sum(axis=0).  Built as a
    # balanced tree of the CTX one-hot comparisons (no zeros init, shorter
    # dependency chain feeding the matmul).
    partial = [(idx[:, c:c + 1] == vocab_iota).astype(jnp.float32)
               for c in range(ctx)]
    while len(partial) > 1:
        nxt = [partial[i] + partial[i + 1]
               for i in range(0, len(partial) - 1, 2)]
        if len(partial) % 2:
            nxt.append(partial[-1])
        partial = nxt
    counts = partial[0]                                                # (TB, V_pad)

    # Single bf16 MXU pass with f32 accumulation:
    #   logits = counts @ (E @ W^T) + b      (K = V_pad = 128)
    # counts values (0..CTX) are exactly representable in bf16.
    logits = jnp.dot(counts.astype(jnp.bfloat16), m_ref[...],
                     preferred_element_type=jnp.float32)
    logits = logits + b_ref[...]                                       # (TB, V_pad)

    # log_softmax over the vocab axis (f32).  Padded columns carry a -1e30
    # bias, so exp(z) underflows to exactly 0 there and the normalization
    # is unchanged.
    m = jnp.max(logits, axis=-1, keepdims=True)
    z = logits - m
    lse = jnp.log(jnp.sum(jnp.exp(z), axis=-1, keepdims=True))
    o_ref[...] = z - lse


def prepare_cbow_params(embedding_table, linear_weight, linear_bias):
    """One-time parameter prep: fold E @ W^T, pad, and cast to bf16."""
    vocab_size, _ = embedding_table.shape
    vocab_pad = _round_up(vocab_size, LANE)

    # Fold the two matmuls once, outside the kernel, in full f32 precision.
    m_core = jnp.dot(embedding_table.astype(jnp.float32),
                     jnp.transpose(linear_weight).astype(jnp.float32),
                     precision=jax.lax.Precision.HIGHEST)              # (V, V)

    m_p = jnp.zeros((vocab_pad, vocab_pad), jnp.float32)
    m_p = m_p.at[:vocab_size, :vocab_size].set(m_core)
    m_p = m_p.astype(jnp.bfloat16)                                     # 1 MXU pass

    b_p = jnp.full((1, vocab_pad), NEG_INF, jnp.float32)
    b_p = b_p.at[0, :vocab_size].set(linear_bias.astype(jnp.float32))
    return m_p, b_p, int(vocab_size)


@functools.partial(jax.jit, static_argnames=("vocab_size",))
def cbow_forward_batched(indices, m_p, b_p, *, vocab_size):
    """indices: (B, CONTEXT_SIZE) int32.  Returns (B, vocab_size) f32 log-probs.

    Each output row equals the PyTorch module's (1, vocab) forward for that
    row's context; the batch axis only fills the MXU / amortizes launch cost.
    """
    b, ctx = indices.shape
    vocab_pad = m_p.shape[1]

    # Fewer, larger batch tiles: small batches get one rounded-up tile,
    # large batches get 256-row tiles (matches v6e/v7x MXU M streaming).
    tb = min(TB_MAX, _round_up(b, SUBLANE))
    b_pad = _round_up(b, tb)

    idx = jnp.clip(indices.astype(jnp.int32), 0, vocab_size - 1)  # no OOB reads
    if b_pad != b:
        idx = jnp.pad(idx, ((0, b_pad - b), (0, 0)))

    out = pl.pallas_call(
        cbow_kernel,
        out_shape=jax.ShapeDtypeStruct((b_pad, vocab_pad), jnp.float32),
        grid_spec=pltpu.PrefetchScalarGridSpec(
            num_scalar_prefetch=0,
            grid=(b_pad // tb,),
            in_specs=[
                pl.BlockSpec((tb, ctx), lambda i: (i, 0)),
                # Folded weight + bias: constant block index -> fetched once,
                # stays resident in VMEM across all batch tiles.
                pl.BlockSpec((vocab_pad, vocab_pad), lambda i: (0, 0)),
                pl.BlockSpec((1, vocab_pad), lambda i: (0, 0)),
            ],
            out_specs=pl.BlockSpec((tb, vocab_pad), lambda i: (i, 0)),
        ),
        compiler_params=pltpu.CompilerParams(
            dimension_semantics=("parallel",)),   # batch tiles -> 2 TCs on v7x
    )(idx, m_p, b_p)

    return out[:b, :vocab_size]


def cbow_forward_single(context_indices, m_p, b_p, *, vocab_size):
    """Exact original-module signature: (CONTEXT_SIZE,) ids -> (1, vocab) log-probs."""
    return cbow_forward_batched(context_indices.reshape(1, -1),
                                m_p, b_p, vocab_size=vocab_size)


def reference_forward_batched(indices, embedding_table, linear_weight, linear_bias):
    """Pure-JAX f32 reference with identical per-row semantics to the PyTorch module."""
    embeds_sum = embedding_table[indices].sum(axis=1)                 # (B, D)
    logits = jnp.dot(embeds_sum, linear_weight.T,
                     precision=jax.lax.Precision.HIGHEST) + linear_bias
    return jax.nn.log_softmax(logits, axis=-1)                        # (B, V)


if __name__ == "__main__":
    key = jax.random.PRNGKey(0)
    k_emb, k_w, k_b, k_idx = jax.random.split(key, 4)

    # Deterministic parameter init (shapes match nn.Embedding / nn.Linear).
    embedding_table = jax.random.normal(k_emb, (VOCAB_SIZE, EMBED_DIM), jnp.float32)
    bound = 1.0 / jnp.sqrt(EMBED_DIM)
    linear_weight = jax.random.uniform(
        k_w, (VOCAB_SIZE, EMBED_DIM), jnp.float32, -bound, bound)
    linear_bias = jax.random.uniform(
        k_b, (VOCAB_SIZE,), jnp.float32, -bound, bound)

    # One-time parameter prep (fold + padding + bf16 cast hoisted out of the forward).
    m_p, b_p, vocab_size = prepare_cbow_params(
        embedding_table, linear_weight, linear_bias)

    # Batched forward: 256 contexts in one pallas_call (a single 256-row tile).
    B = 256
    batch_idx = jax.random.randint(k_idx, (B, CONTEXT_SIZE), 0, VOCAB_SIZE, jnp.int32)
    out = cbow_forward_batched(batch_idx, m_p, b_p, vocab_size=vocab_size)
    out = jax.block_until_ready(out)

    ref = reference_forward_batched(batch_idx, embedding_table, linear_weight, linear_bias)
    assert out.shape == (B, VOCAB_SIZE)
    # Tolerance relaxed vs. the f32 reference: the kernel uses a single bf16
    # MXU pass (f32 accumulate) instead of the old 6-pass HIGHEST emulation.
    assert jnp.allclose(out, ref, atol=2e-2, rtol=2e-2), \
        float(jnp.max(jnp.abs(out - ref)))

    # Single-context path (the original module's forward signature).
    out1 = jax.block_until_ready(
        cbow_forward_single(batch_idx[0], m_p, b_p, vocab_size=vocab_size))
    assert out1.shape == (1, VOCAB_SIZE)
    assert jnp.allclose(out1, ref[0:1], atol=2e-2, rtol=2e-2)

    print("KERNEL_OK")
</pallas_src>

<mosaic_0001>
module attributes {stable_mosaic.version = 11 : i64} {
  func.func @cbow_kernel(%arg0: i32, %arg1: memref<256x4xi32, #tpu.memory_space<vmem>>, %arg2: memref<128x128xbf16, #tpu.memory_space<vmem>>, %arg3: memref<1x128xf32, #tpu.memory_space<vmem>>, %arg4: memref<256x128xf32, #tpu.memory_space<vmem>>) attributes {dimension_semantics = [#tpu.dimension_semantics<parallel>], iteration_bounds = array<i64: 1>, scalar_prefetch = 0 : i64, scratch_operands = 0 : i64, tpu.core_type = #tpu.core_type<tc>, window_params = [{transform_indices = @transform_0, window_bounds = array<i64: 256, 4>}, {pipeline_mode = #tpu.pipeline_mode<synchronous>, transform_indices = @transform_1, window_bounds = array<i64: 128, 128>}, {pipeline_mode = #tpu.pipeline_mode<synchronous>, transform_indices = @transform_2, window_bounds = array<i64: 1, 128>}, {transform_indices = @transform_3, window_bounds = array<i64: 256, 128>}]} {
    %c0 = arith.constant 0 : index
    %c0_0 = arith.constant 0 : index
    %0 = vector.load %arg1[%c0, %c0_0] : memref<256x4xi32, #tpu.memory_space<vmem>>, vector<256x4xi32>
    %1 = tpu.iota {dimensions = array<i32: 1>} : vector<256x128xi32>
    %2 = vector.extract_strided_slice %0 {offsets = [0, 0], sizes = [256, 1], strides = [1, 1]} : vector<256x4xi32> to vector<256x1xi32>
    %3 = vector.broadcast %2 : vector<256x1xi32> to vector<256x128xi32>
    %4 = arith.cmpi eq, %3, %1 : vector<256x128xi32>
    %5 = arith.extui %4 : vector<256x128xi1> to vector<256x128xi32>
    %6 = arith.sitofp %5 : vector<256x128xi32> to vector<256x128xf32>
    %7 = vector.extract_strided_slice %0 {offsets = [0, 1], sizes = [256, 1], strides = [1, 1]} : vector<256x4xi32> to vector<256x1xi32>
    %8 = vector.broadcast %7 : vector<256x1xi32> to vector<256x128xi32>
    %9 = arith.cmpi eq, %8, %1 : vector<256x128xi32>
    %10 = arith.extui %9 : vector<256x128xi1> to vector<256x128xi32>
    %11 = arith.sitofp %10 : vector<256x128xi32> to vector<256x128xf32>
    %12 = vector.extract_strided_slice %0 {offsets = [0, 2], sizes = [256, 1], strides = [1, 1]} : vector<256x4xi32> to vector<256x1xi32>
    %13 = vector.broadcast %12 : vector<256x1xi32> to vector<256x128xi32>
    %14 = arith.cmpi eq, %13, %1 : vector<256x128xi32>
    %15 = arith.extui %14 : vector<256x128xi1> to vector<256x128xi32>
    %16 = arith.sitofp %15 : vector<256x128xi32> to vector<256x128xf32>
    %17 = vector.extract_strided_slice %0 {offsets = [0, 3], sizes = [256, 1], strides = [1, 1]} : vector<256x4xi32> to vector<256x1xi32>
    %18 = vector.broadcast %17 : vector<256x1xi32> to vector<256x128xi32>
    %19 = arith.cmpi eq, %18, %1 : vector<256x128xi32>
    %20 = arith.extui %19 : vector<256x128xi1> to vector<256x128xi32>
    %21 = arith.sitofp %20 : vector<256x128xi32> to vector<256x128xf32>
    %22 = arith.addf %6, %11 : vector<256x128xf32>
    %23 = arith.addf %16, %21 : vector<256x128xf32>
    %24 = arith.addf %22, %23 : vector<256x128xf32>
    %25 = arith.truncf %24 : vector<256x128xf32> to vector<256x128xbf16>
    %c0_1 = arith.constant 0 : index
    %c0_2 = arith.constant 0 : index
    %26 = vector.load %arg2[%c0_1, %c0_2] : memref<128x128xbf16, #tpu.memory_space<vmem>>, vector<128x128xbf16>
    %cst = arith.constant dense<0.000000e+00> : vector<256x128xf32>
    %27 = tpu.matmul %25, %26, %cst {dimension_numbers = #tpu.dot_dimension_numbers<[1], [0], [0], [1], [0, 0, 1, 1], [], []>} : vector<256x128xbf16>, vector<128x128xbf16>, vector<256x128xf32> -> vector<256x128xf32>
    %c0_3 = arith.constant 0 : index
    %c0_4 = arith.constant 0 : index
    %28 = vector.load %arg3[%c0_3, %c0_4] : memref<1x128xf32, #tpu.memory_space<vmem>>, vector<1x128xf32>
    %29 = vector.broadcast %28 : vector<1x128xf32> to vector<256x128xf32>
    %30 = arith.addf %27, %29 : vector<256x128xf32>
    %cst_5 = arith.constant dense<0xFF800000> : vector<256xf32>
    %31 = vector.multi_reduction <maximumf>, %30, %cst_5 [1] : vector<256x128xf32> to vector<256xf32>
    %32 = vector.shape_cast %31 : vector<256xf32> to vector<256x1xf32>
    %33 = vector.broadcast %32 : vector<256x1xf32> to vector<256x128xf32>
    %34 = arith.subf %30, %33 : vector<256x128xf32>
    %35 = math.exp %34 : vector<256x128xf32>
    %cst_6 = arith.constant dense<0.000000e+00> : vector<256xf32>
    %36 = vector.multi_reduction <add>, %35, %cst_6 [1] : vector<256x128xf32> to vector<256xf32>
    %37 = vector.shape_cast %36 : vector<256xf32> to vector<256x1xf32>
    %38 = math.log %37 : vector<256x1xf32>
    %39 = vector.broadcast %38 : vector<256x1xf32> to vector<256x128xf32>
    %40 = arith.subf %34, %39 : vector<256x128xf32>
    %c0_7 = arith.constant 0 : index
    %c0_8 = arith.constant 0 : index
    %41 = vector.load %arg4[%c0_7, %c0_8] : memref<256x128xf32, #tpu.memory_space<vmem>>, vector<256x128xf32>
    tpu.vector_store %arg4[%c0_7, %c0_8], %40 {strides = array<i32>} : memref<256x128xf32, #tpu.memory_space<vmem>>, vector<256x128xf32>,
    return
  }
  func.func @transform_0(%arg0: i32) -> (i32, i32) {
    %c0_i32 = arith.constant 0 : i32
    %c0_i32_0 = arith.constant 0 : i32
    return %arg0, %c0_i32 : i32, i32
  }
  func.func @transform_1(%arg0: i32) -> (i32, i32) {
    %c0_i32 = arith.constant 0 : i32
    %c0_i32_0 = arith.constant 0 : i32
    %c0_i32_1 = arith.constant 0 : i32
    return %c0_i32, %c0_i32_0 : i32, i32
  }
  func.func @transform_2(%arg0: i32) -> (i32, i32) {
    %c0_i32 = arith.constant 0 : i32
    %c0_i32_0 = arith.constant 0 : i32
    %c0_i32_1 = arith.constant 0 : i32
    return %c0_i32, %c0_i32_0 : i32, i32
  }
  func.func @transform_3(%arg0: i32) -> (i32, i32) {
    %c0_i32 = arith.constant 0 : i32
    %c0_i32_0 = arith.constant 0 : i32
    return %arg0, %c0_i32 : i32, i32
  }
}

</mosaic_0001>

<llo_original>
// kernel: cbow_forward_batched.1
$region0: #{cbow_forward_batched.1}
  #allocation0 [shape = 'u32[]', space=smem, size = 0x4, offset = 0x4, fixed_abs, tag = 'smem constant byte address 0x4 - core index']
  #allocation1 [shape = 'u32[72,128]{1,0:T(1,128)}', space=vmem, size = 0x9000, scoped, tag = 'internal scratch']
  %s0 = inlined_call_operand.vmem [shape: s32[256,4], index: 0, kind: input, shape index: {}]
  %s1 = inlined_call_operand.vmem [shape: bf16[128,128], index: 1, kind: input, shape index: {}]
  %s2 = inlined_call_operand.vmem [shape: f32[1,128], index: 2, kind: input, shape index: {}]
  %s3 = inlined_call_operand.vmem [shape: f32[256,128], index: 3, kind: output, shape index: {}]
  %s4 = sld [smem:[#allocation0]]
  $region22: #{cbow_forward_batched.1} parent=0
    _
  %s6 = ssub.s32 1, %s4
  %s7 = scalar_select 0, %s6, %s4
  // Predicated region
  $region2: #{cbow_forward_batched.1} parent=0 // pred_check
    _
  $region3: #{cbow_forward_batched.1} parent=0 // pred_check_branch
    %9 = sbr.rel (0) target = $region5
  $region4: #{cbow_forward_batched.1} parent=0 // pred_region
    _
  $region5: #{cbow_forward_batched.1} parent=0 // pred_fallthru
    _
  // Predicated region
  $region6: #{cbow_forward_batched.1} parent=0 // pred_check
    _
  $region7: #{cbow_forward_batched.1} parent=0 // pred_check_branch
    %11 = sbr.rel (0) target = $region9
  $region8: #{cbow_forward_batched.1} parent=0 // pred_region
    _
  $region9: #{cbow_forward_batched.1} parent=0 // pred_fallthru
    _
  // Predicated region
  $region10: #{cbow_forward_batched.1} parent=0 // pred_check
    _
  $region11: #{cbow_forward_batched.1} parent=0 // pred_check_branch
    %13 = sbr.rel (0) target = $region13
  $region12: #{cbow_forward_batched.1} parent=0 // pred_region
    _
  $region13: #{cbow_forward_batched.1} parent=0 // pred_fallthru
    _
  %v14 = vld [vmem:[%s0] sm:$0xff]
  %v15 = vld [vmem:[%s0 + $0x8] sm:$0xff]
  %v16 = vld [vmem:[%s0 + $0x10] sm:$0xff]
  %v17 = vld [vmem:[%s0 + $0x18] sm:$0xff]
  %v18 = vld [vmem:[%s0 + $0x20] sm:$0xff]
  %v19 = vld [vmem:[%s0 + $0x28] sm:$0xff]
  %v20 = vld [vmem:[%s0 + $0x30] sm:$0xff]
  %v21 = vld [vmem:[%s0 + $0x38] sm:$0xff]
  %v22 = vld [vmem:[%s0 + $0x40] sm:$0xff]
  %v23 = vld [vmem:[%s0 + $0x48] sm:$0xff]
  %v24 = vld [vmem:[%s0 + $0x50] sm:$0xff]
  %v25 = vld [vmem:[%s0 + $0x58] sm:$0xff]
  %v26 = vld [vmem:[%s0 + $0x60] sm:$0xff]
  %v27 = vld [vmem:[%s0 + $0x68] sm:$0xff]
  %v28 = vld [vmem:[%s0 + $0x70] sm:$0xff]
  %v29 = vld [vmem:[%s0 + $0x78] sm:$0xff]
  %v30 = vld [vmem:[%s0 + $0x80] sm:$0xff]
  %v31 = vld [vmem:[%s0 + $0x88] sm:$0xff]
  %v32 = vld [vmem:[%s0 + $0x90] sm:$0xff]
  %v33 = vld [vmem:[%s0 + $0x98] sm:$0xff]
  %v34 = vld [vmem:[%s0 + $0xa0] sm:$0xff]
  %v35 = vld [vmem:[%s0 + $0xa8] sm:$0xff]
  %v36 = vld [vmem:[%s0 + $0xb0] sm:$0xff]
  %v37 = vld [vmem:[%s0 + $0xb8] sm:$0xff]
  %v38 = vld [vmem:[%s0 + $0xc0] sm:$0xff]
  %v39 = vld [vmem:[%s0 + $0xc8] sm:$0xff]
  %v40 = vld [vmem:[%s0 + $0xd0] sm:$0xff]
  %v41 = vld [vmem:[%s0 + $0xd8] sm:$0xff]
  %v42 = vld [vmem:[%s0 + $0xe0] sm:$0xff]
  %v43 = vld [vmem:[%s0 + $0xe8] sm:$0xff]
  %v44 = vld [vmem:[%s0 + $0xf0] sm:$0xff]
  %v45 = vld [vmem:[%s0 + $0xf8] sm:$0xff]
  %v46 = vlaneseq
  %v47 = vand.u32 %v46, 127
  %48 = vset.pattern.permute.xlu0 0
  %49 = vperm.xlu0 %48, %v14
  %v50 = vpop.permute.xlu0 %49
  %51 = vset.pattern.permute.xlu0 0
  %52 = vperm.xlu0 %51, %v15
  %v53 = vpop.permute.xlu0 %52
  %54 = vset.pattern.permute.xlu0 0
  %55 = vperm.xlu0 %54, %v16
  %v56 = vpop.permute.xlu0 %55
  %57 = vset.pattern.permute.xlu0 0
  %58 = vperm.xlu0 %57, %v17
  %v59 = vpop.permute.xlu0 %58
  %60 = vset.pattern.permute.xlu0 0
  %61 = vperm.xlu0 %60, %v18
  %v62 = vpop.permute.xlu0 %61
  %63 = vset.pattern.permute.xlu0 0
  %64 = vperm.xlu0 %63, %v19
  %v65 = vpop.permute.xlu0 %64
  %66 = vset.pattern.permute.xlu0 0
  %67 = vperm.xlu0 %66, %v20
  %v68 = vpop.permute.xlu0 %67
  %69 = vset.pattern.permute.xlu0 0
  %70 = vperm.xlu0 %69, %v21
  %v71 = vpop.permute.xlu0 %70
  %72 = vset.pattern.permute.xlu0 0
  %73 = vperm.xlu0 %72, %v22
  %v74 = vpop.permute.xlu0 %73
  %75 = vset.pattern.permute.xlu0 0
  %76 = vperm.xlu0 %75, %v23
  %v77 = vpop.permute.xlu0 %76
  %78 = vset.pattern.permute.xlu0 0
  %79 = vperm.xlu0 %78, %v24
  %v80 = vpop.permute.xlu0 %79
  %81 = vset.pattern.permute.xlu0 0
  %82 = vperm.xlu0 %81, %v25
  %v83 = vpop.permute.xlu0 %82
  %84 = vset.pattern.permute.xlu0 0
  %85 = vperm.xlu0 %84, %v26
  %v86 = vpop.permute.xlu0 %85
  %87 = vset.pattern.permute.xlu0 0
  %88 = vperm.xlu0 %87, %v27
  %v89 = vpop.permute.xlu0 %88
  %90 = vset.pattern.permute.xlu0 0
  %91 = vperm.xlu0 %90, %v28
  %v92 = vpop.permute.xlu0 %91
  %93 = vset.pattern.permute.xlu0 0
  %94 = vperm.xlu0 %93, %v29
  %v95 = vpop.permute.xlu0 %94
  %96 = vset.pattern.permute.xlu0 0
  %97 = vperm.xlu0 %96, %v30
  %v98 = vpop.permute.xlu0 %97
  %99 = vset.pattern.permute.xlu0 0
  %100 = vperm.xlu0 %99, %v31
  %v101 = vpop.permute.xlu0 %100
  %102 = vset.pattern.permute.xlu0 0
  %103 = vperm.xlu0 %102, %v32
  %v104 = vpop.permute.xlu0 %103
  %105 = vset.pattern.permute.xlu0 0
  %106 = vperm.xlu0 %105, %v33
  %v107 = vpop.permute.xlu0 %106
  %108 = vset.pattern.permute.xlu0 0
  %109 = vperm.xlu0 %108, %v34
  %v110 = vpop.permute.xlu0 %109
  %111 = vset.pattern.permute.xlu0 0
  %112 = vperm.xlu0 %111, %v35
  %v113 = vpop.permute.xlu0 %112
  %114 = vset.pattern.permute.xlu0 0
  %115 = vperm.xlu0 %114, %v36
  %v116 = vpop.permute.xlu0 %115
  %117 = vset.pattern.permute.xlu0 0
  %118 = vperm.xlu0 %117, %v37
  %v119 = vpop.permute.xlu0 %118
  %120 = vset.pattern.permute.xlu0 0
  %121 = vperm.xlu0 %120, %v38
  %v122 = vpop.permute.xlu0 %121
  %123 = vset.pattern.permute.xlu0 0
  %124 = vperm.xlu0 %123, %v39
  %v125 = vpop.permute.xlu0 %124
  %126 = vset.pattern.permute.xlu0 0
  %127 = vperm.xlu0 %126, %v40
  %v128 = vpop.permute.xlu0 %127
  %129 = vset.pattern.permute.xlu0 0
  %130 = vperm.xlu0 %129, %v41
  %v131 = vpop.permute.xlu0 %130
  %132 = vset.pattern.permute.xlu0 0
  %133 = vperm.xlu0 %132, %v42
  %v134 = vpop.permute.xlu0 %133
  %135 = vset.pattern.permute.xlu0 0
  %136 = vperm.xlu0 %135, %v43
  %v137 = vpop.permute.xlu0 %136
  %138 = vset.pattern.permute.xlu0 0
  %139 = vperm.xlu0 %138, %v44
  %v140 = vpop.permute.xlu0 %139
  %141 = vset.pattern.permute.xlu0 0
  %142 = vperm.xlu0 %141, %v45
  %v143 = vpop.permute.xlu0 %142
  %vm144 = vcmp.eq.s32.totalorder %v50, %v47
  %vm145 = vcmp.eq.s32.totalorder %v53, %v47
  %vm146 = vcmp.eq.s32.totalorder %v56, %v47
  %vm147 = vcmp.eq.s32.totalorder %v59, %v47
  %vm148 = vcmp.eq.s32.totalorder %v62, %v47
  %vm149 = vcmp.eq.s32.totalorder %v65, %v47
  %vm150 = vcmp.eq.s32.totalorder %v68, %v47
  %vm151 = vcmp.eq.s32.totalorder %v71, %v47
  %vm152 = vcmp.eq.s32.totalorder %v74, %v47
  %vm153 = vcmp.eq.s32.totalorder %v77, %v47
  %vm154 = vcmp.eq.s32.totalorder %v80, %v47
  %vm155 = vcmp.eq.s32.totalorder %v83, %v47
  %vm156 = vcmp.eq.s32.totalorder %v86, %v47
  %vm157 = vcmp.eq.s32.totalorder %v89, %v47
  %vm158 = vcmp.eq.s32.totalorder %v92, %v47
  %vm159 = vcmp.eq.s32.totalorder %v95, %v47
  %vm160 = vcmp.eq.s32.totalorder %v98, %v47
  %vm161 = vcmp.eq.s32.totalorder %v101, %v47
  %vm162 = vcmp.eq.s32.totalorder %v104, %v47
  %vm163 = vcmp.eq.s32.totalorder %v107, %v47
  %vm164 = vcmp.eq.s32.totalorder %v110, %v47
  %vm165 = vcmp.eq.s32.totalorder %v113, %v47
  %vm166 = vcmp.eq.s32.totalorder %v116, %v47
  %vm167 = vcmp.eq.s32.totalorder %v119, %v47
  %vm168 = vcmp.eq.s32.totalorder %v122, %v47
  %vm169 = vcmp.eq.s32.totalorder %v125, %v47
  %vm170 = vcmp.eq.s32.totalorder %v128, %v47
  %vm171 = vcmp.eq.s32.totalorder %v131, %v47
  %vm172 = vcmp.eq.s32.totalorder %v134, %v47
  %vm173 = vcmp.eq.s32.totalorder %v137, %v47
  %vm174 = vcmp.eq.s32.totalorder %v140, %v47
  %vm175 = vcmp.eq.s32.totalorder %v143, %v47
  %v176 = vsel %vm144, 1, 0
  %v177 = vsel %vm145, 1, 0
  %v178 = vsel %vm146, 1, 0
  %v179 = vsel %vm147, 1, 0
  %v180 = vsel %vm148, 1, 0
  %v181 = vsel %vm149, 1, 0
  %v182 = vsel %vm150, 1, 0
  %v183 = vsel %vm151, 1, 0
  %v184 = vsel %vm152, 1, 0
  %v185 = vsel %vm153, 1, 0
  %v186 = vsel %vm154, 1, 0
  %v187 = vsel %vm155, 1, 0
  %v188 = vsel %vm156, 1, 0
  %v189 = vsel %vm157, 1, 0
  %v190 = vsel %vm158, 1, 0
  %v191 = vsel %vm159, 1, 0
  %v192 = vsel %vm160, 1, 0
  %v193 = vsel %vm161, 1, 0
  %v194 = vsel %vm162, 1, 0
  %v195 = vsel %vm163, 1, 0
  %v196 = vsel %vm164, 1, 0
  %v197 = vsel %vm165, 1, 0
  %v198 = vsel %vm166, 1, 0
  %v199 = vsel %vm167, 1, 0
  %v200 = vsel %vm168, 1, 0
  %v201 = vsel %vm169, 1, 0
  %v202 = vsel %vm170, 1, 0
  %v203 = vsel %vm171, 1, 0
  %v204 = vsel %vm172, 1, 0
  %v205 = vsel %vm173, 1, 0
  %v206 = vsel %vm174, 1, 0
  %v207 = vsel %vm175, 1, 0
  %v208 = vcvt.s32.f32 %v176
  %v209 = vcvt.s32.f32 %v177
  %v210 = vcvt.s32.f32 %v178
  %v211 = vcvt.s32.f32 %v179
  %v212 = vcvt.s32.f32 %v180
  %v213 = vcvt.s32.f32 %v181
  %v214 = vcvt.s32.f32 %v182
  %v215 = vcvt.s32.f32 %v183
  %v216 = vcvt.s32.f32 %v184
  %v217 = vcvt.s32.f32 %v185
  %v218 = vcvt.s32.f32 %v186
  %v219 = vcvt.s32.f32 %v187
  %v220 = vcvt.s32.f32 %v188
  %v221 = vcvt.s32.f32 %v189
  %v222 = vcvt.s32.f32 %v190
  %v223 = vcvt.s32.f32 %v191
  %v224 = vcvt.s32.f32 %v192
  %v225 = vcvt.s32.f32 %v193
  %v226 = vcvt.s32.f32 %v194
  %v227 = vcvt.s32.f32 %v195
  %v228 = vcvt.s32.f32 %v196
  %v229 = vcvt.s32.f32 %v197
  %v230 = vcvt.s32.f32 %v198
  %v231 = vcvt.s32.f32 %v199
  %v232 = vcvt.s32.f32 %v200
  %v233 = vcvt.s32.f32 %v201
  %v234 = vcvt.s32.f32 %v202
  %v235 = vcvt.s32.f32 %v203
  %v236 = vcvt.s32.f32 %v204
  %v237 = vcvt.s32.f32 %v205
  %v238 = vcvt.s32.f32 %v206
  %v239 = vcvt.s32.f32 %v207
  %240 = vset.pattern.permute.xlu0 1
  %241 = vperm.xlu0 %240, %v14
  %v242 = vpop.permute.xlu0 %241
  %243 = vset.pattern.permute.xlu0 1
  %244 = vperm.xlu0 %243, %v15
  %v245 = vpop.permute.xlu0 %244
  %246 = vset.pattern.permute.xlu0 1
  %247 = vperm.xlu0 %246, %v16
  %v248 = vpop.permute.xlu0 %247
  %249 = vset.pattern.permute.xlu0 1
  %250 = vperm.xlu0 %249, %v17
  %v251 = vpop.permute.xlu0 %250
  %252 = vset.pattern.permute.xlu0 1
  %253 = vperm.xlu0 %252, %v18
  %v254 = vpop.permute.xlu0 %253
  %255 = vset.pattern.permute.xlu0 1
  %256 = vperm.xlu0 %255, %v19
  %v257 = vpop.permute.xlu0 %256
  %258 = vset.pattern.permute.xlu0 1
  %259 = vperm.xlu0 %258, %v20
  %v260 = vpop.permute.xlu0 %259
  %261 = vset.pattern.permute.xlu0 1
  %262 = vperm.xlu0 %261, %v21
  %v263 = vpop.permute.xlu0 %262
  %264 = vset.pattern.permute.xlu0 1
  %265 = vperm.xlu0 %264, %v22
  %v266 = vpop.permute.xlu0 %265
  %267 = vset.pattern.permute.xlu0 1
  %268 = vperm.xlu0 %267, %v23
  %v269 = vpop.permute.xlu0 %268
  %270 = vset.pattern.permute.xlu0 1
  %271 = vperm.xlu0 %270, %v24
  %v272 = vpop.permute.xlu0 %271
  %273 = vset.pattern.permute.xlu0 1
  %274 = vperm.xlu0 %273, %v25
  %v275 = vpop.permute.xlu0 %274
  %276 = vset.pattern.permute.xlu0 1
  %277 = vperm.xlu0 %276, %v26
  %v278 = vpop.permute.xlu0 %277
  %279 = vset.pattern.permute.xlu0 1
  %280 = vperm.xlu0 %279, %v27
  %v281 = vpop.permute.xlu0 %280
  %282 = vset.pattern.permute.xlu0 1
  %283 = vperm.xlu0 %282, %v28
  %v284 = vpop.permute.xlu0 %283
  %285 = vset.pattern.permute.xlu0 1
  %286 = vperm.xlu0 %285, %v29
  %v287 = vpop.permute.xlu0 %286
  %288 = vset.pattern.permute.xlu0 1
  %289 = vperm.xlu0 %288, %v30
  %v290 = vpop.permute.xlu0 %289
  %291 = vset.pattern.permute.xlu0 1
  %292 = vperm.xlu0 %291, %v31
  %v293 = vpop.permute.xlu0 %292
  %294 = vset.pattern.permute.xlu0 1
  %295 = vperm.xlu0 %294, %v32
  %v296 = vpop.permute.xlu0 %295
  %297 = vset.pattern.permute.xlu0 1
  %298 = vperm.xlu0 %297, %v33
  %v299 = vpop.permute.xlu0 %298
  %300 = vset.pattern.permute.xlu0 1
  %301 = vperm.xlu0 %300, %v34
  %v302 = vpop.permute.xlu0 %301
  %303 = vset.pattern.permute.xlu0 1
  %304 = vperm.xlu0 %303, %v35
  %v305 = vpop.permute.xlu0 %304
  %306 = vset.pattern.permute.xlu0 1
  %307 = vperm.xlu0 %306, %v36
  %v308 = vpop.permute.xlu0 %307
  %309 = vset.pattern.permute.xlu0 1
  %310 = vperm.xlu0 %309, %v37
  %v311 = vpop.permute.xlu0 %310
  %312 = vset.pattern.permute.xlu0 1
  %313 = vperm.xlu0 %312, %v38
  %v314 = vpop.permute.xlu0 %313
  %315 = vset.pattern.permute.xlu0 1
  %316 = vperm.xlu0 %315, %v39
  %v317 = vpop.permute.xlu0 %316
  %318 = vset.pattern.permute.xlu0 1
  %319 = vperm.xlu0 %318, %v40
  %v320 = vpop.permute.xlu0 %319
  %321 = vset.pattern.permute.xlu0 1
  %322 = vperm.xlu0 %321, %v41
  %v323 = vpop.permute.xlu0 %322
  %324 = vset.pattern.permute.xlu0 1
  %325 = vperm.xlu0 %324, %v42
  %v326 = vpop.permute.xlu0 %325
  %327 = vset.pattern.permute.xlu0 1
  %328 = vperm.xlu0 %327, %v43
  %v329 = vpop.permute.xlu0 %328
  %330 = vset.pattern.permute.xlu0 1
  %331 = vperm.xlu0 %330, %v44
  %v332 = vpop.permute.xlu0 %331
  %333 = vset.pattern.permute.xlu0 1
  %334 = vperm.xlu0 %333, %v45
  %v335 = vpop.permute.xlu0 %334
  %vm336 = vcmp.eq.s32.totalorder %v242, %v47
  %vm337 = vcmp.eq.s32.totalorder %v245, %v47
  %vm338 = vcmp.eq.s32.totalorder %v248, %v47
  %vm339 = vcmp.eq.s32.totalorder %v251, %v47
  %vm340 = vcmp.eq.s32.totalorder %v254, %v47
  %vm341 = vcmp.eq.s32.totalorder %v257, %v47
  %vm342 = vcmp.eq.s32.totalorder %v260, %v47
  %vm343 = vcmp.eq.s32.totalorder %v263, %v47
  %vm344 = vcmp.eq.s32.totalorder %v266, %v47
  %vm345 = vcmp.eq.s32.totalorder %v269, %v47
  %vm346 = vcmp.eq.s32.totalorder %v272, %v47
  %vm347 = vcmp.eq.s32.totalorder %v275, %v47
  %vm348 = vcmp.eq.s32.totalorder %v278, %v47
  %vm349 = vcmp.eq.s32.totalorder %v281, %v47
  %vm350 = vcmp.eq.s32.totalorder %v284, %v47
  %vm351 = vcmp.eq.s32.totalorder %v287, %v47
  %vm352 = vcmp.eq.s32.totalorder %v290, %v47
  %vm353 = vcmp.eq.s32.totalorder %v293, %v47
  %vm354 = vcmp.eq.s32.totalorder %v296, %v47
  %vm355 = vcmp.eq.s32.totalorder %v299, %v47
  %vm356 = vcmp.eq.s32.totalorder %v302, %v47
  %vm357 = vcmp.eq.s32.totalorder %v305, %v47
  %vm358 = vcmp.eq.s32.totalorder %v308, %v47
  %vm359 = vcmp.eq.s32.totalorder %v311, %v47
  %vm360 = vcmp.eq.s32.totalorder %v314, %v47
  %vm361 = vcmp.eq.s32.totalorder %v317, %v47
  %vm362 = vcmp.eq.s32.totalorder %v320, %v47
  %vm363 = vcmp.eq.s32.totalorder %v323, %v47
  %vm364 = vcmp.eq.s32.totalorder %v326, %v47
  %vm365 = vcmp.eq.s32.totalorder %v329, %v47
  %vm366 = vcmp.eq.s32.totalorder %v332, %v47
  %vm367 = vcmp.eq.s32.totalorder %v335, %v47
  %v368 = vsel %vm336, 1, 0
  %v369 = vsel %vm337, 1, 0
  %v370 = vsel %vm338, 1, 0
  %v371 = vsel %vm339, 1, 0
  %v372 = vsel %vm340, 1, 0
  %v373 = vsel %vm341, 1, 0
  %v374 = vsel %vm342, 1, 0
  %v375 = vsel %vm343, 1, 0
  %v376 = vsel %vm344, 1, 0
  %v377 = vsel %vm345, 1, 0
  %v378 = vsel %vm346, 1, 0
  %v379 = vsel %vm347, 1, 0
  %v380 = vsel %vm348, 1, 0
  %v381 = vsel %vm349, 1, 0
  %v382 = vsel %vm350, 1, 0
  %v383 = vsel %vm351, 1, 0
  %v384 = vsel %vm352, 1, 0
  %v385 = vsel %vm353, 1, 0
  %v386 = vsel %vm354, 1, 0
  %v387 = vsel %vm355, 1, 0
  %v388 = vsel %vm356, 1, 0
  %v389 = vsel %vm357, 1, 0
  %v390 = vsel %vm358, 1, 0
  %v391 = vsel %vm359, 1, 0
  %v392 = vsel %vm360, 1, 0
  %v393 = vsel %vm361, 1, 0
  %v394 = vsel %vm362, 1, 0
  %v395 = vsel %vm363, 1, 0
  %v396 = vsel %vm364, 1, 0
  %v397 = vsel %vm365, 1, 0
  %v398 = vsel %vm366, 1, 0
  %v399 = vsel %vm367, 1, 0
  %v400 = vcvt.s32.f32 %v368
  %v401 = vcvt.s32.f32 %v369
  %v402 = vcvt.s32.f32 %v370
  %v403 = vcvt.s32.f32 %v371
  %v404 = vcvt.s32.f32 %v372
  %v405 = vcvt.s32.f32 %v373
  %v406 = vcvt.s32.f32 %v374
  %v407 = vcvt.s32.f32 %v375
  %v408 = vcvt.s32.f32 %v376
  %v409 = vcvt.s32.f32 %v377
  %v410 = vcvt.s32.f32 %v378
  %v411 = vcvt.s32.f32 %v379
  %v412 = vcvt.s32.f32 %v380
  %v413 = vcvt.s32.f32 %v381
  %v414 = vcvt.s32.f32 %v382
  %v415 = vcvt.s32.f32 %v383
  %v416 = vcvt.s32.f32 %v384
  %v417 = vcvt.s32.f32 %v385
  %v418 = vcvt.s32.f32 %v386
  %v419 = vcvt.s32.f32 %v387
  %v420 = vcvt.s32.f32 %v388
  %v421 = vcvt.s32.f32 %v389
  %v422 = vcvt.s32.f32 %v390
  %v423 = vcvt.s32.f32 %v391
  %v424 = vcvt.s32.f32 %v392
  %v425 = vcvt.s32.f32 %v393
  %v426 = vcvt.s32.f32 %v394
  %v427 = vcvt.s32.f32 %v395
  %v428 = vcvt.s32.f32 %v396
  %v429 = vcvt.s32.f32 %v397
  %v430 = vcvt.s32.f32 %v398
  %v431 = vcvt.s32.f32 %v399
  %432 = vset.pattern.permute.xlu0 2
  %433 = vperm.xlu0 %432, %v14
  %v434 = vpop.permute.xlu0 %433
  %435 = vset.pattern.permute.xlu0 2
  %436 = vperm.xlu0 %435, %v15
  %v437 = vpop.permute.xlu0 %436
  %438 = vset.pattern.permute.xlu0 2
  %439 = vperm.xlu0 %438, %v16
  %v440 = vpop.permute.xlu0 %439
  %441 = vset.pattern.permute.xlu0 2
  %442 = vperm.xlu0 %441, %v17
  %v443 = vpop.permute.xlu0 %442
  %444 = vset.pattern.permute.xlu0 2
  %445 = vperm.xlu0 %444, %v18
  %v446 = vpop.permute.xlu0 %445
  %447 = vset.pattern.permute.xlu0 2
  %448 = vperm.xlu0 %447, %v19
  %v449 = vpop.permute.xlu0 %448
  %450 = vset.pattern.permute.xlu0 2
  %451 = vperm.xlu0 %450, %v20
  %v452 = vpop.permute.xlu0 %451
  %453 = vset.pattern.permute.xlu0 2
  %454 = vperm.xlu0 %453, %v21
  %v455 = vpop.permute.xlu0 %454
  %456 = vset.pattern.permute.xlu0 2
  %457 = vperm.xlu0 %456, %v22
  %v458 = vpop.permute.xlu0 %457
  %459 = vset.pattern.permute.xlu0 2
  %460 = vperm.xlu0 %459, %v23
  %v461 = vpop.permute.xlu0 %460
  %462 = vset.pattern.permute.xlu0 2
  %463 = vperm.xlu0 %462, %v24
  %v464 = vpop.permute.xlu0 %463
  %465 = vset.pattern.permute.xlu0 2
  %466 = vperm.xlu0 %465, %v25
  %v467 = vpop.permute.xlu0 %466
  %468 = vset.pattern.permute.xlu0 2
  %469 = vperm.xlu0 %468, %v26
  %v470 = vpop.permute.xlu0 %469
  %471 = vset.pattern.permute.xlu0 2
  %472 = vperm.xlu0 %471, %v27
  %v473 = vpop.permute.xlu0 %472
  %474 = vset.pattern.permute.xlu0 2
  %475 = vperm.xlu0 %474, %v28
  %v476 = vpop.permute.xlu0 %475
  %477 = vset.pattern.permute.xlu0 2
  %478 = vperm.xlu0 %477, %v29
  %v479 = vpop.permute.xlu0 %478
  %480 = vset.pattern.permute.xlu0 2
  %481 = vperm.xlu0 %480, %v30
  %v482 = vpop.permute.xlu0 %481
  %483 = vset.pattern.permute.xlu0 2
  %484 = vperm.xlu0 %483, %v31
  %v485 = vpop.permute.xlu0 %484
  %486 = vset.pattern.permute.xlu0 2
  %487 = vperm.xlu0 %486, %v32
  %v488 = vpop.permute.xlu0 %487
  %489 = vset.pattern.permute.xlu0 2
  %490 = vperm.xlu0 %489, %v33
  %v491 = vpop.permute.xlu0 %490
  %492 = vset.pattern.permute.xlu0 2
  %493 = vperm.xlu0 %492, %v34
  %v494 = vpop.permute.xlu0 %493
  %495 = vset.pattern.permute.xlu0 2
  %496 = vperm.xlu0 %495, %v35
  %v497 = vpop.permute.xlu0 %496
  %498 = vset.pattern.permute.xlu0 2
  %499 = vperm.xlu0 %498, %v36
  %v500 = vpop.permute.xlu0 %499
  %501 = vset.pattern.permute.xlu0 2
  %502 = vperm.xlu0 %501, %v37
  %v503 = vpop.permute.xlu0 %502
  %504 = vset.pattern.permute.xlu0 2
  %505 = vperm.xlu0 %504, %v38
  %v506 = vpop.permute.xlu0 %505
  %507 = vset.pattern.permute.xlu0 2
  %508 = vperm.xlu0 %507, %v39
  %v509 = vpop.permute.xlu0 %508
  %510 = vset.pattern.permute.xlu0 2
  %511 = vperm.xlu0 %510, %v40
  %v512 = vpop.permute.xlu0 %511
  %513 = vset.pattern.permute.xlu0 2
  %514 = vperm.xlu0 %513, %v41
  %v515 = vpop.permute.xlu0 %514
  %516 = vset.pattern.permute.xlu0 2
  %517 = vperm.xlu0 %516, %v42
  %v518 = vpop.permute.xlu0 %517
  %519 = vset.pattern.permute.xlu0 2
  %520 = vperm.xlu0 %519, %v43
  %v521 = vpop.permute.xlu0 %520
  %522 = vset.pattern.permute.xlu0 2
  %523 = vperm.xlu0 %522, %v44
  %v524 = vpop.permute.xlu0 %523
  %525 = vset.pattern.permute.xlu0 2
  %526 = vperm.xlu0 %525, %v45
  %v527 = vpop.permute.xlu0 %526
  %vm528 = vcmp.eq.s32.totalorder %v434, %v47
  %vm529 = vcmp.eq.s32.totalorder %v437, %v47
  %vm530 = vcmp.eq.s32.totalorder %v440, %v47
  %vm531 = vcmp.eq.s32.totalorder %v443, %v47
  %vm532 = vcmp.eq.s32.totalorder %v446, %v47
  %vm533 = vcmp.eq.s32.totalorder %v449, %v47
  %vm534 = vcmp.eq.s32.totalorder %v452, %v47
  %vm535 = vcmp.eq.s32.totalorder %v455, %v47
  %vm536 = vcmp.eq.s32.totalorder %v458, %v47
  %vm537 = vcmp.eq.s32.totalorder %v461, %v47
  %vm538 = vcmp.eq.s32.totalorder %v464, %v47
  %vm539 = vcmp.eq.s32.totalorder %v467, %v47
  %vm540 = vcmp.eq.s32.totalorder %v470, %v47
  %vm541 = vcmp.eq.s32.totalorder %v473, %v47
  %vm542 = vcmp.eq.s32.totalorder %v476, %v47
  %vm543 = vcmp.eq.s32.totalorder %v479, %v47
  %vm544 = vcmp.eq.s32.totalorder %v482, %v47
  %vm545 = vcmp.eq.s32.totalorder %v485, %v47
  %vm546 = vcmp.eq.s32.totalorder %v488, %v47
  %vm547 = vcmp.eq.s32.totalorder %v491, %v47
  %vm548 = vcmp.eq.s32.totalorder %v494, %v47
  %vm549 = vcmp.eq.s32.totalorder %v497, %v47
  %vm550 = vcmp.eq.s32.totalorder %v500, %v47
  %vm551 = vcmp.eq.s32.totalorder %v503, %v47
  %vm552 = vcmp.eq.s32.totalorder %v506, %v47
  %vm553 = vcmp.eq.s32.totalorder %v509, %v47
  %vm554 = vcmp.eq.s32.totalorder %v512, %v47
  %vm555 = vcmp.eq.s32.totalorder %v515, %v47
  %vm556 = vcmp.eq.s32.totalorder %v518, %v47
  %vm557 = vcmp.eq.s32.totalorder %v521, %v47
  %vm558 = vcmp.eq.s32.totalorder %v524, %v47
  %vm559 = vcmp.eq.s32.totalorder %v527, %v47
  %v560 = vsel %vm528, 1, 0
  %v561 = vsel %vm529, 1, 0
  %v562 = vsel %vm530, 1, 0
  %v563 = vsel %vm531, 1, 0
  %v564 = vsel %vm532, 1, 0
  %v565 = vsel %vm533, 1, 0
  %v566 = vsel %vm534, 1, 0
  %v567 = vsel %vm535, 1, 0
  %v568 = vsel %vm536, 1, 0
  %v569 = vsel %vm537, 1, 0
  %v570 = vsel %vm538, 1, 0
  %v571 = vsel %vm539, 1, 0
  %v572 = vsel %vm540, 1, 0
  %v573 = vsel %vm541, 1, 0
  %v574 = vsel %vm542, 1, 0
  %v575 = vsel %vm543, 1, 0
  %v576 = vsel %vm544, 1, 0
  %v577 = vsel %vm545, 1, 0
  %v578 = vsel %vm546, 1, 0
  %v579 = vsel %vm547, 1, 0
  %v580 = vsel %vm548, 1, 0
  %v581 = vsel %vm549, 1, 0
  %v582 = vsel %vm550, 1, 0
  %v583 = vsel %vm551, 1, 0
  %v584 = vsel %vm552, 1, 0
  %v585 = vsel %vm553, 1, 0
  %v586 = vsel %vm554, 1, 0
  %v587 = vsel %vm555, 1, 0
  %v588 = vsel %vm556, 1, 0
  %v589 = vsel %vm557, 1, 0
  %v590 = vsel %vm558, 1, 0
  %v591 = vsel %vm559, 1, 0
  %v592 = vcvt.s32.f32 %v560
  %v593 = vcvt.s32.f32 %v561
  %v594 = vcvt.s32.f32 %v562
  %v595 = vcvt.s32.f32 %v563
  %v596 = vcvt.s32.f32 %v564
  %v597 = vcvt.s32.f32 %v565
  %v598 = vcvt.s32.f32 %v566
  %v599 = vcvt.s32.f32 %v567
  %v600 = vcvt.s32.f32 %v568
  %v601 = vcvt.s32.f32 %v569
  %v602 = vcvt.s32.f32 %v570
  %v603 = vcvt.s32.f32 %v571
  %v604 = vcvt.s32.f32 %v572
  %v605 = vcvt.s32.f32 %v573
  %v606 = vcvt.s32.f32 %v574
  %v607 = vcvt.s32.f32 %v575
  %v608 = vcvt.s32.f32 %v576
  %v609 = vcvt.s32.f32 %v577
  %v610 = vcvt.s32.f32 %v578
  %v611 = vcvt.s32.f32 %v579
  %v612 = vcvt.s32.f32 %v580
  %v613 = vcvt.s32.f32 %v581
  %v614 = vcvt.s32.f32 %v582
  %v615 = vcvt.s32.f32 %v583
  %v616 = vcvt.s32.f32 %v584
  %v617 = vcvt.s32.f32 %v585
  %v618 = vcvt.s32.f32 %v586
  %v619 = vcvt.s32.f32 %v587
  %v620 = vcvt.s32.f32 %v588
  %v621 = vcvt.s32.f32 %v589
  %v622 = vcvt.s32.f32 %v590
  %v623 = vcvt.s32.f32 %v591
  %624 = vset.pattern.permute.xlu0 3
  %625 = vperm.xlu0 %624, %v14
  %v626 = vpop.permute.xlu0 %625
  %627 = vset.pattern.permute.xlu0 3
  %628 = vperm.xlu0 %627, %v15
  %v629 = vpop.permute.xlu0 %628
  %630 = vset.pattern.permute.xlu0 3
  %631 = vperm.xlu0 %630, %v16
  %v632 = vpop.permute.xlu0 %631
  %633 = vset.pattern.permute.xlu0 3
  %634 = vperm.xlu0 %633, %v17
  %v635 = vpop.permute.xlu0 %634
  %636 = vset.pattern.permute.xlu0 3
  %637 = vperm.xlu0 %636, %v18
  %v638 = vpop.permute.xlu0 %637
  %639 = vset.pattern.permute.xlu0 3
  %640 = vperm.xlu0 %639, %v19
  %v641 = vpop.permute.xlu0 %640
  %642 = vset.pattern.permute.xlu0 3
  %643 = vperm.xlu0 %642, %v20
  %v644 = vpop.permute.xlu0 %643
  %645 = vset.pattern.permute.xlu0 3
  %646 = vperm.xlu0 %645, %v21
  %v647 = vpop.permute.xlu0 %646
  %648 = vset.pattern.permute.xlu0 3
  %649 = vperm.xlu0 %648, %v22
  %v650 = vpop.permute.xlu0 %649
  %651 = vset.pattern.permute.xlu0 3
  %652 = vperm.xlu0 %651, %v23
  %v653 = vpop.permute.xlu0 %652
  %654 = vset.pattern.permute.xlu0 3
  %655 = vperm.xlu0 %654, %v24
  %v656 = vpop.permute.xlu0 %655
  %657 = vset.pattern.permute.xlu0 3
  %658 = vperm.xlu0 %657, %v25
  %v659 = vpop.permute.xlu0 %658
  %660 = vset.pattern.permute.xlu0 3
  %661 = vperm.xlu0 %660, %v26
  %v662 = vpop.permute.xlu0 %661
  %663 = vset.pattern.permute.xlu0 3
  %664 = vperm.xlu0 %663, %v27
  %v665 = vpop.permute.xlu0 %664
  %666 = vset.pattern.permute.xlu0 3
  %667 = vperm.xlu0 %666, %v28
  %v668 = vpop.permute.xlu0 %667
  %669 = vset.pattern.permute.xlu0 3
  %670 = vperm.xlu0 %669, %v29
  %v671 = vpop.permute.xlu0 %670
  %672 = vset.pattern.permute.xlu0 3
  %673 = vperm.xlu0 %672, %v30
  %v674 = vpop.permute.xlu0 %673
  %675 = vset.pattern.permute.xlu0 3
  %676 = vperm.xlu0 %675, %v31
  %v677 = vpop.permute.xlu0 %676
  %678 = vset.pattern.permute.xlu0 3
  %679 = vperm.xlu0 %678, %v32
  %v680 = vpop.permute.xlu0 %679
  %681 = vset.pattern.permute.xlu0 3
  %682 = vperm.xlu0 %681, %v33
  %v683 = vpop.permute.xlu0 %682
  %684 = vset.pattern.permute.xlu0 3
  %685 = vperm.xlu0 %684, %v34
  %v686 = vpop.permute.xlu0 %685
  %687 = vset.pattern.permute.xlu0 3
  %688 = vperm.xlu0 %687, %v35
  %v689 = vpop.permute.xlu0 %688
  %690 = vset.pattern.permute.xlu0 3
  %691 = vperm.xlu0 %690, %v36
  %v692 = vpop.permute.xlu0 %691
  %693 = vset.pattern.permute.xlu0 3
  %694 = vperm.xlu0 %693, %v37
  %v695 = vpop.permute.xlu0 %694
  %696 = vset.pattern.permute.xlu0 3
  %697 = vperm.xlu0 %696, %v38
  %v698 = vpop.permute.xlu0 %697
  %699 = vset.pattern.permute.xlu0 3
  %700 = vperm.xlu0 %699, %v39
  %v701 = vpop.permute.xlu0 %700
  %702 = vset.pattern.permute.xlu0 3
  %703 = vperm.xlu0 %702, %v40
  %v704 = vpop.permute.xlu0 %703
  %705 = vset.pattern.permute.xlu0 3
  %706 = vperm.xlu0 %705, %v41
  %v707 = vpop.permute.xlu0 %706
  %708 = vset.pattern.permute.xlu0 3
  %709 = vperm.xlu0 %708, %v42
  %v710 = vpop.permute.xlu0 %709
  %711 = vset.pattern.permute.xlu0 3
  %712 = vperm.xlu0 %711, %v43
  %v713 = vpop.permute.xlu0 %712
  %714 = vset.pattern.permute.xlu0 3
  %715 = vperm.xlu0 %714, %v44
  %v716 = vpop.permute.xlu0 %715
  %717 = vset.pattern.permute.xlu0 3
  %718 = vperm.xlu0 %717, %v45
  %v719 = vpop.permute.xlu0 %718
  %vm720 = vcmp.eq.s32.totalorder %v626, %v47
  %vm721 = vcmp.eq.s32.totalorder %v629, %v47
  %vm722 = vcmp.eq.s32.totalorder %v632, %v47
  %vm723 = vcmp.eq.s32.totalorder %v635, %v47
  %vm724 = vcmp.eq.s32.totalorder %v638, %v47
  %vm725 = vcmp.eq.s32.totalorder %v641, %v47
  %vm726 = vcmp.eq.s32.totalorder %v644, %v47
  %vm727 = vcmp.eq.s32.totalorder %v647, %v47
  %vm728 = vcmp.eq.s32.totalorder %v650, %v47
  %vm729 = vcmp.eq.s32.totalorder %v653, %v47
  %vm730 = vcmp.eq.s32.totalorder %v656, %v47
  %vm731 = vcmp.eq.s32.totalorder %v659, %v47
  %vm732 = vcmp.eq.s32.totalorder %v662, %v47
  %vm733 = vcmp.eq.s32.totalorder %v665, %v47
  %vm734 = vcmp.eq.s32.totalorder %v668, %v47
  %vm735 = vcmp.eq.s32.totalorder %v671, %v47
  %vm736 = vcmp.eq.s32.totalorder %v674, %v47
  %vm737 = vcmp.eq.s32.totalorder %v677, %v47
  %vm738 = vcmp.eq.s32.totalorder %v680, %v47
  %vm739 = vcmp.eq.s32.totalorder %v683, %v47
  %vm740 = vcmp.eq.s32.totalorder %v686, %v47
  %vm741 = vcmp.eq.s32.totalorder %v689, %v47
  %vm742 = vcmp.eq.s32.totalorder %v692, %v47
  %vm743 = vcmp.eq.s32.totalorder %v695, %v47
  %vm744 = vcmp.eq.s32.totalorder %v698, %v47
  %vm745 = vcmp.eq.s32.totalorder %v701, %v47
  %vm746 = vcmp.eq.s32.totalorder %v704, %v47
  %vm747 = vcmp.eq.s32.totalorder %v707, %v47
  %vm748 = vcmp.eq.s32.totalorder %v710, %v47
  %vm749 = vcmp.eq.s32.totalorder %v713, %v47
  %vm750 = vcmp.eq.s32.totalorder %v716, %v47
  %vm751 = vcmp.eq.s32.totalorder %v719, %v47
  %v752 = vsel %vm720, 1, 0
  %v753 = vsel %vm721, 1, 0
  %v754 = vsel %vm722, 1, 0
  %v755 = vsel %vm723, 1, 0
  %v756 = vsel %vm724, 1, 0
  %v757 = vsel %vm725, 1, 0
  %v758 = vsel %vm726, 1, 0
  %v759 = vsel %vm727, 1, 0
  %v760 = vsel %vm728, 1, 0
  %v761 = vsel %vm729, 1, 0
  %v762 = vsel %vm730, 1, 0
  %v763 = vsel %vm731, 1, 0
  %v764 = vsel %vm732, 1, 0
  %v765 = vsel %vm733, 1, 0
  %v766 = vsel %vm734, 1, 0
  %v767 = vsel %vm735, 1, 0
  %v768 = vsel %vm736, 1, 0
  %v769 = vsel %vm737, 1, 0
  %v770 = vsel %vm738, 1, 0
  %v771 = vsel %vm739, 1, 0
  %v772 = vsel %vm740, 1, 0
  %v773 = vsel %vm741, 1, 0
  %v774 = vsel %vm742, 1, 0
  %v775 = vsel %vm743, 1, 0
  %v776 = vsel %vm744, 1, 0
  %v777 = vsel %vm745, 1, 0
  %v778 = vsel %vm746, 1, 0
  %v779 = vsel %vm747, 1, 0
  %v780 = vsel %vm748, 1, 0
  %v781 = vsel %vm749, 1, 0
  %v782 = vsel %vm750, 1, 0
  %v783 = vsel %vm751, 1, 0
  %v784 = vcvt.s32.f32 %v752
  %v785 = vcvt.s32.f32 %v753
  %v786 = vcvt.s32.f32 %v754
  %v787 = vcvt.s32.f32 %v755
  %v788 = vcvt.s32.f32 %v756
  %v789 = vcvt.s32.f32 %v757
  %v790 = vcvt.s32.f32 %v758
  %v791 = vcvt.s32.f32 %v759
  %v792 = vcvt.s32.f32 %v760
  %v793 = vcvt.s32.f32 %v761
  %v794 = vcvt.s32.f32 %v762
  %v795 = vcvt.s32.f32 %v763
  %v796 = vcvt.s32.f32 %v764
  %v797 = vcvt.s32.f32 %v765
  %v798 = vcvt.s32.f32 %v766
  %v799 = vcvt.s32.f32 %v767
  %v800 = vcvt.s32.f32 %v768
  %v801 = vcvt.s32.f32 %v769
  %v802 = vcvt.s32.f32 %v770
  %v803 = vcvt.s32.f32 %v771
  %v804 = vcvt.s32.f32 %v772
  %v805 = vcvt.s32.f32 %v773
  %v806 = vcvt.s32.f32 %v774
  %v807 = vcvt.s32.f32 %v775
  %v808 = vcvt.s32.f32 %v776
  %v809 = vcvt.s32.f32 %v777
  %v810 = vcvt.s32.f32 %v778
  %v811 = vcvt.s32.f32 %v779
  %v812 = vcvt.s32.f32 %v780
  %v813 = vcvt.s32.f32 %v781
  %v814 = vcvt.s32.f32 %v782
  %v815 = vcvt.s32.f32 %v783
  %v816 = vadd.f32 %v208, %v400
  %v817 = vadd.f32 %v209, %v401
  %v818 = vadd.f32 %v210, %v402
  %v819 = vadd.f32 %v211, %v403
  %v820 = vadd.f32 %v212, %v404
  %v821 = vadd.f32 %v213, %v405
  %v822 = vadd.f32 %v214, %v406
  %v823 = vadd.f32 %v215, %v407
  %v824 = vadd.f32 %v216, %v408
  %v825 = vadd.f32 %v217, %v409
  %v826 = vadd.f32 %v218, %v410
  %v827 = vadd.f32 %v219, %v411
  %v828 = vadd.f32 %v220, %v412
  %v829 = vadd.f32 %v221, %v413
  %v830 = vadd.f32 %v222, %v414
  %v831 = vadd.f32 %v223, %v415
  %v832 = vadd.f32 %v224, %v416
  %v833 = vadd.f32 %v225, %v417
  %v834 = vadd.f32 %v226, %v418
  %v835 = vadd.f32 %v227, %v419
  %v836 = vadd.f32 %v228, %v420
  %v837 = vadd.f32 %v229, %v421
  %v838 = vadd.f32 %v230, %v422
  %v839 = vadd.f32 %v231, %v423
  %v840 = vadd.f32 %v232, %v424
  %v841 = vadd.f32 %v233, %v425
  %v842 = vadd.f32 %v234, %v426
  %v843 = vadd.f32 %v235, %v427
  %v844 = vadd.f32 %v236, %v428
  %v845 = vadd.f32 %v237, %v429
  %v846 = vadd.f32 %v238, %v430
  %v847 = vadd.f32 %v239, %v431
  %v848 = vadd.f32 %v592, %v784
  %v849 = vadd.f32 %v593, %v785
  %v850 = vadd.f32 %v594, %v786
  %v851 = vadd.f32 %v595, %v787
  %v852 = vadd.f32 %v596, %v788
  %v853 = vadd.f32 %v597, %v789
  %v854 = vadd.f32 %v598, %v790
  %v855 = vadd.f32 %v599, %v791
  %v856 = vadd.f32 %v600, %v792
  %v857 = vadd.f32 %v601, %v793
  %v858 = vadd.f32 %v602, %v794
  %v859 = vadd.f32 %v603, %v795
  %v860 = vadd.f32 %v604, %v796
  %v861 = vadd.f32 %v605, %v797
  %v862 = vadd.f32 %v606, %v798
  %v863 = vadd.f32 %v607, %v799
  %v864 = vadd.f32 %v608, %v800
  %v865 = vadd.f32 %v609, %v801
  %v866 = vadd.f32 %v610, %v802
  %v867 = vadd.f32 %v611, %v803
  %v868 = vadd.f32 %v612, %v804
  %v869 = vadd.f32 %v613, %v805
  %v870 = vadd.f32 %v614, %v806
  %v871 = vadd.f32 %v615, %v807
  %v872 = vadd.f32 %v616, %v808
  %v873 = vadd.f32 %v617, %v809
  %v874 = vadd.f32 %v618, %v810
  %v875 = vadd.f32 %v619, %v811
  %v876 = vadd.f32 %v620, %v812
  %v877 = vadd.f32 %v621, %v813
  %v878 = vadd.f32 %v622, %v814
  %v879 = vadd.f32 %v623, %v815
  %v880 = vadd.f32 %v816, %v848
  %v881 = vadd.f32 %v817, %v849
  %v882 = vadd.f32 %v818, %v850
  %v883 = vadd.f32 %v819, %v851
  %v884 = vadd.f32 %v820, %v852
  %v885 = vadd.f32 %v821, %v853
  %v886 = vadd.f32 %v822, %v854
  %v887 = vadd.f32 %v823, %v855
  %v888 = vadd.f32 %v824, %v856
  %v889 = vadd.f32 %v825, %v857
  %v890 = vadd.f32 %v826, %v858
  %v891 = vadd.f32 %v827, %v859
  %v892 = vadd.f32 %v828, %v860
  %v893 = vadd.f32 %v829, %v861
  %v894 = vadd.f32 %v830, %v862
  %v895 = vadd.f32 %v831, %v863
  %v896 = vadd.f32 %v832, %v864
  %v897 = vadd.f32 %v833, %v865
  %v898 = vadd.f32 %v834, %v866
  %v899 = vadd.f32 %v835, %v867
  %v900 = vadd.f32 %v836, %v868
  %v901 = vadd.f32 %v837, %v869
  %v902 = vadd.f32 %v838, %v870
  %v903 = vadd.f32 %v839, %v871
  %v904 = vadd.f32 %v840, %v872
  %v905 = vadd.f32 %v841, %v873
  %v906 = vadd.f32 %v842, %v874
  %v907 = vadd.f32 %v843, %v875
  %v908 = vadd.f32 %v844, %v876
  %v909 = vadd.f32 %v845, %v877
  %v910 = vadd.f32 %v846, %v878
  %v911 = vadd.f32 %v847, %v879
  %v912 = vpack.c.bf16 %v881, %v880
  %v913 = vpack.c.bf16 %v883, %v882
  %v914 = vpack.c.bf16 %v885, %v884
  %v915 = vpack.c.bf16 %v887, %v886
  %v916 = vpack.c.bf16 %v889, %v888
  %v917 = vpack.c.bf16 %v891, %v890
  %v918 = vpack.c.bf16 %v893, %v892
  %v919 = vpack.c.bf16 %v895, %v894
  %v920 = vpack.c.bf16 %v897, %v896
  %v921 = vpack.c.bf16 %v899, %v898
  %v922 = vpack.c.bf16 %v901, %v900
  %v923 = vpack.c.bf16 %v903, %v902
  %v924 = vpack.c.bf16 %v905, %v904
  %v925 = vpack.c.bf16 %v907, %v906
  %v926 = vpack.c.bf16 %v909, %v908
  %v927 = vpack.c.bf16 %v911, %v910
  %v928 = vld [vmem:[%s1] sm:$0xf]
  %v929 = vld [vmem:[%s1 + $0x4] sm:$0xf]
  %v930 = vld [vmem:[%s1 + $0x8] sm:$0xf]
  %v931 = vld [vmem:[%s1 + $0xc] sm:$0xf]
  %v932 = vld [vmem:[%s1 + $0x10] sm:$0xf]
  %v933 = vld [vmem:[%s1 + $0x14] sm:$0xf]
  %v934 = vld [vmem:[%s1 + $0x18] sm:$0xf]
  %v935 = vld [vmem:[%s1 + $0x1c] sm:$0xf]
  %v936 = vld [vmem:[%s1 + $0x20] sm:$0xf]
  %v937 = vld [vmem:[%s1 + $0x24] sm:$0xf]
  %v938 = vld [vmem:[%s1 + $0x28] sm:$0xf]
  %v939 = vld [vmem:[%s1 + $0x2c] sm:$0xf]
  %v940 = vld [vmem:[%s1 + $0x30] sm:$0xf]
  %v941 = vld [vmem:[%s1 + $0x34] sm:$0xf]
  %v942 = vld [vmem:[%s1 + $0x38] sm:$0xf]
  %v943 = vld [vmem:[%s1 + $0x3c] sm:$0xf]
  %v944 = vld [vmem:[%s2] sm:$0x1]
  %v946 = vperm.slane %v944, 0
  %v964 = vunpack.c.l.b16 %v928
  %v965 = vunpack.c.l.b16 %v929
  %v966 = vunpack.c.l.b16 %v930
  %v967 = vunpack.c.l.b16 %v931
  %v968 = vunpack.c.l.b16 %v932
  %v969 = vunpack.c.l.b16 %v933
  %v970 = vunpack.c.l.b16 %v934
  %v971 = vunpack.c.l.b16 %v935
  %v972 = vunpack.c.l.b16 %v936
  %v973 = vunpack.c.l.b16 %v937
  %v974 = vunpack.c.l.b16 %v938
  %v975 = vunpack.c.l.b16 %v939
  %v976 = vunpack.c.l.b16 %v940
  %v977 = vunpack.c.l.b16 %v941
  %v978 = vunpack.c.l.b16 %v942
  %v979 = vunpack.c.l.b16 %v943
  %v980 = vpack.c.b16 %v965, %v964
  %v981 = vpack.c.b16 %v967, %v966
  %v982 = vpack.c.b16 %v969, %v968
  %v983 = vpack.c.b16 %v971, %v970
  %v984 = vpack.c.b16 %v973, %v972
  %v985 = vpack.c.b16 %v975, %v974
  %v986 = vpack.c.b16 %v977, %v976
  %v987 = vpack.c.b16 %v979, %v978
  %996 = vmatpush.bf16.msra.mxu0 %v987
  %997 = vmatpush.bf16.msra.mxu0 %v986
  %998 = vmatpush.bf16.msra.mxu0 %v985
  %999 = vmatpush.bf16.msra.mxu0 %v984
  %1000 = vmatpush.bf16.msra.mxu0 %v983
  %1001 = vmatpush.bf16.msra.mxu0 %v982
  %1002 = vmatpush.bf16.msra.mxu0 %v981
  %1003 = vmatpush.bf16.msra.mxu0 %v980
  %1004 = vmatmul.bf16.gmra.mxu0 %v912
  %v1005 = vpop.f32.mrf.mxu0
  %v1006 = vadd.f32 %v946, %v1005
  %v1007 = vpop.f32.mrf.mxu0
  %v1008 = vadd.f32 %v946, %v1007
  %1009 = vmatmul.bf16.gmra.mxu0 %v913
  %v1010 = vpop.f32.mrf.mxu0
  %v1011 = vadd.f32 %v946, %v1010
  %v1012 = vpop.f32.mrf.mxu0
  %v1013 = vadd.f32 %v946, %v1012
  %1014 = vmatmul.bf16.gmra.mxu0 %v914
  %v1015 = vpop.f32.mrf.mxu0
  %v1016 = vadd.f32 %v946, %v1015
  %v1017 = vpop.f32.mrf.mxu0
  %v1018 = vadd.f32 %v946, %v1017
  %1019 = vmatmul.bf16.gmra.mxu0 %v915
  %v1020 = vpop.f32.mrf.mxu0
  %v1021 = vadd.f32 %v946, %v1020
  %v1022 = vpop.f32.mrf.mxu0
  %v1023 = vadd.f32 %v946, %v1022
  %1024 = vmatmul.bf16.gmra.mxu0 %v916
  %v1025 = vpop.f32.mrf.mxu0
  %v1026 = vadd.f32 %v946, %v1025
  %v1027 = vpop.f32.mrf.mxu0
  %v1028 = vadd.f32 %v946, %v1027
  %1029 = vmatmul.bf16.gmra.mxu0 %v917
  %v1030 = vpop.f32.mrf.mxu0
  %v1031 = vadd.f32 %v946, %v1030
  %v1032 = vpop.f32.mrf.mxu0
  %v1033 = vadd.f32 %v946, %v1032
  %1034 = vmatmul.bf16.gmra.mxu0 %v918
  %v1035 = vpop.f32.mrf.mxu0
  %v1036 = vadd.f32 %v946, %v1035
  %v1037 = vpop.f32.mrf.mxu0
  %v1038 = vadd.f32 %v946, %v1037
  %1039 = vmatmul.bf16.gmra.mxu0 %v919
  %v1040 = vpop.f32.mrf.mxu0
  %v1041 = vadd.f32 %v946, %v1040
  %v1042 = vpop.f32.mrf.mxu0
  %v1043 = vadd.f32 %v946, %v1042
  %1044 = vmatmul.bf16.gmra.mxu0 %v920
  %v1045 = vpop.f32.mrf.mxu0
  %v1046 = vadd.f32 %v946, %v1045
  %v1047 = vpop.f32.mrf.mxu0
  %v1048 = vadd.f32 %v946, %v1047
  %1049 = vmatmul.bf16.gmra.mxu0 %v921
  %v1050 = vpop.f32.mrf.mxu0
  %v1051 = vadd.f32 %v946, %v1050
  %v1052 = vpop.f32.mrf.mxu0
  %v1053 = vadd.f32 %v946, %v1052
  %1054 = vmatmul.bf16.gmra.mxu0 %v922
  %v1055 = vpop.f32.mrf.mxu0
  %v1056 = vadd.f32 %v946, %v1055
  %v1057 = vpop.f32.mrf.mxu0
  %v1058 = vadd.f32 %v946, %v1057
  %1059 = vmatmul.bf16.gmra.mxu0 %v923
  %v1060 = vpop.f32.mrf.mxu0
  %v1061 = vadd.f32 %v946, %v1060
  %v1062 = vpop.f32.mrf.mxu0
  %v1063 = vadd.f32 %v946, %v1062
  %1064 = vmatmul.bf16.gmra.mxu0 %v924
  %v1065 = vpop.f32.mrf.mxu0
  %v1066 = vadd.f32 %v946, %v1065
  %v1067 = vpop.f32.mrf.mxu0
  %v1068 = vadd.f32 %v946, %v1067
  %1069 = vmatmul.bf16.gmra.mxu0 %v925
  %v1070 = vpop.f32.mrf.mxu0
  %v1071 = vadd.f32 %v946, %v1070
  %v1072 = vpop.f32.mrf.mxu0
  %v1073 = vadd.f32 %v946, %v1072
  %1074 = vmatmul.bf16.gmra.mxu0 %v926
  %v1075 = vpop.f32.mrf.mxu0
  %v1076 = vadd.f32 %v946, %v1075
  %v1077 = vpop.f32.mrf.mxu0
  %v1078 = vadd.f32 %v946, %v1077
  %1079 = vmatmul.bf16.gmra.mxu0 %v927
  %v1080 = vpop.f32.mrf.mxu0
  %v1081 = vadd.f32 %v946, %v1080
  %v1082 = vpop.f32.mrf.mxu0
  %v1083 = vadd.f32 %v946, %v1082
  %1084 = vdwg.mxu0
  %1085 = vmax.xlane.f32.xlu0 %v1006
  %v1086 = vpop.xlane.xlu0 %1085
  %1087 = vmax.xlane.f32.xlu0 %v1008
  %v1088 = vpop.xlane.xlu0 %1087
  %1089 = vmax.xlane.f32.xlu0 %v1011
  %v1090 = vpop.xlane.xlu0 %1089
  %1091 = vmax.xlane.f32.xlu0 %v1013
  %v1092 = vpop.xlane.xlu0 %1091
  %1093 = vmax.xlane.f32.xlu0 %v1016
  %v1094 = vpop.xlane.xlu0 %1093
  %1095 = vmax.xlane.f32.xlu0 %v1018
  %v1096 = vpop.xlane.xlu0 %1095
  %1097 = vmax.xlane.f32.xlu0 %v1021
  %v1098 = vpop.xlane.xlu0 %1097
  %1099 = vmax.xlane.f32.xlu0 %v1023
  %v1100 = vpop.xlane.xlu0 %1099
  %1101 = vmax.xlane.f32.xlu0 %v1026
  %v1102 = vpop.xlane.xlu0 %1101
  %1103 = vmax.xlane.f32.xlu0 %v1028
  %v1104 = vpop.xlane.xlu0 %1103
  %1105 = vmax.xlane.f32.xlu0 %v1031
  %v1106 = vpop.xlane.xlu0 %1105
  %1107 = vmax.xlane.f32.xlu0 %v1033
  %v1108 = vpop.xlane.xlu0 %1107
  %1109 = vmax.xlane.f32.xlu0 %v1036
  %v1110 = vpop.xlane.xlu0 %1109
  %1111 = vmax.xlane.f32.xlu0 %v1038
  %v1112 = vpop.xlane.xlu0 %1111
  %1113 = vmax.xlane.f32.xlu0 %v1041
  %v1114 = vpop.xlane.xlu0 %1113
  %1115 = vmax.xlane.f32.xlu0 %v1043
  %v1116 = vpop.xlane.xlu0 %1115
  %1117 = vmax.xlane.f32.xlu0 %v1046
  %v1118 = vpop.xlane.xlu0 %1117
  %1119 = vmax.xlane.f32.xlu0 %v1048
  %v1120 = vpop.xlane.xlu0 %1119
  %1121 = vmax.xlane.f32.xlu0 %v1051
  %v1122 = vpop.xlane.xlu0 %1121
  %1123 = vmax.xlane.f32.xlu0 %v1053
  %v1124 = vpop.xlane.xlu0 %1123
  %1125 = vmax.xlane.f32.xlu0 %v1056
  %v1126 = vpop.xlane.xlu0 %1125
  %1127 = vmax.xlane.f32.xlu0 %v1058
  %v1128 = vpop.xlane.xlu0 %1127
  %1129 = vmax.xlane.f32.xlu0 %v1061
  %v1130 = vpop.xlane.xlu0 %1129
  %1131 = vmax.xlane.f32.xlu0 %v1063
  %v1132 = vpop.xlane.xlu0 %1131
  %1133 = vmax.xlane.f32.xlu0 %v1066
  %v1134 = vpop.xlane.xlu0 %1133
  %1135 = vmax.xlane.f32.xlu0 %v1068
  %v1136 = vpop.xlane.xlu0 %1135
  %1137 = vmax.xlane.f32.xlu0 %v1071
  %v1138 = vpop.xlane.xlu0 %1137
  %1139 = vmax.xlane.f32.xlu0 %v1073
  %v1140 = vpop.xlane.xlu0 %1139
  %1141 = vmax.xlane.f32.xlu0 %v1076
  %v1142 = vpop.xlane.xlu0 %1141
  %1143 = vmax.xlane.f32.xlu0 %v1078
  %v1144 = vpop.xlane.xlu0 %1143
  %1145 = vmax.xlane.f32.xlu0 %v1081
  %v1146 = vpop.xlane.xlu0 %1145
  %1147 = vmax.xlane.f32.xlu0 %v1083
  %v1148 = vpop.xlane.xlu0 %1147
  %v1149 = vsub.f32 %v1006, %v1086
  %v1150 = vsub.f32 %v1008, %v1088
  %v1151 = vsub.f32 %v1011, %v1090
  %v1152 = vsub.f32 %v1013, %v1092
  %v1153 = vsub.f32 %v1016, %v1094
  %v1154 = vsub.f32 %v1018, %v1096
  %v1155 = vsub.f32 %v1021, %v1098
  %v1156 = vsub.f32 %v1023, %v1100
  %v1157 = vsub.f32 %v1026, %v1102
  %v1158 = vsub.f32 %v1028, %v1104
  %v1159 = vsub.f32 %v1031, %v1106
  %v1160 = vsub.f32 %v1033, %v1108
  %v1161 = vsub.f32 %v1036, %v1110
  %v1162 = vsub.f32 %v1038, %v1112
  %v1163 = vsub.f32 %v1041, %v1114
  %v1164 = vsub.f32 %v1043, %v1116
  %v1165 = vsub.f32 %v1046, %v1118
  %v1166 = vsub.f32 %v1048, %v1120
  %v1167 = vsub.f32 %v1051, %v1122
  %v1168 = vsub.f32 %v1053, %v1124
  %v1169 = vsub.f32 %v1056, %v1126
  %v1170 = vsub.f32 %v1058, %v1128
  %v1171 = vsub.f32 %v1061, %v1130
  %v1172 = vsub.f32 %v1063, %v1132
  %v1173 = vsub.f32 %v1066, %v1134
  %v1174 = vsub.f32 %v1068, %v1136
  %v1175 = vsub.f32 %v1071, %v1138
  %v1176 = vsub.f32 %v1073, %v1140
  %v1177 = vsub.f32 %v1076, %v1142
  %v1178 = vsub.f32 %v1078, %v1144
  %v1179 = vsub.f32 %v1081, %v1146
  %v1180 = vsub.f32 %v1083, %v1148
  %v1181 = vmul.f32 %v1149, 1.442695
  %v1182 = vpow.pop %v1181
  %v1183 = vmul.f32 %v1150, 1.442695
  %v1184 = vpow.pop %v1183
  %v1185 = vmul.f32 %v1151, 1.442695
  %v1186 = vpow.pop %v1185
  %v1187 = vmul.f32 %v1152, 1.442695
  %v1188 = vpow.pop %v1187
  %v1189 = vmul.f32 %v1153, 1.442695
  %v1190 = vpow.pop %v1189
  %v1191 = vmul.f32 %v1154, 1.442695
  %v1192 = vpow.pop %v1191
  %v1193 = vmul.f32 %v1155, 1.442695
  %v1194 = vpow.pop %v1193
  %v1195 = vmul.f32 %v1156, 1.442695
  %v1196 = vpow.pop %v1195
  %v1197 = vmul.f32 %v1157, 1.442695
  %v1198 = vpow.pop %v1197
  %v1199 = vmul.f32 %v1158, 1.442695
  %v1200 = vpow.pop %v1199
  %v1201 = vmul.f32 %v1159, 1.442695
  %v1202 = vpow.pop %v1201
  %v1203 = vmul.f32 %v1160, 1.442695
  %v1204 = vpow.pop %v1203
  %v1205 = vmul.f32 %v1161, 1.442695
  %v1206 = vpow.pop %v1205
  %v1207 = vmul.f32 %v1162, 1.442695
  %v1208 = vpow.pop %v1207
  %v1209 = vmul.f32 %v1163, 1.442695
  %v1210 = vpow.pop %v1209
  %v1211 = vmul.f32 %v1164, 1.442695
  %v1212 = vpow.pop %v1211
  %v1213 = vmul.f32 %v1165, 1.442695
  %v1214 = vpow.pop %v1213
  %v1215 = vmul.f32 %v1166, 1.442695
  %v1216 = vpow.pop %v1215
  %v1217 = vmul.f32 %v1167, 1.442695
  %v1218 = vpow.pop %v1217
  %v1219 = vmul.f32 %v1168, 1.442695
  %v1220 = vpow.pop %v1219
  %v1221 = vmul.f32 %v1169, 1.442695
  %v1222 = vpow.pop %v1221
  %v1223 = vmul.f32 %v1170, 1.442695
  %v1224 = vpow.pop %v1223
  %v1225 = vmul.f32 %v1171, 1.442695
  %v1226 = vpow.pop %v1225
  %v1227 = vmul.f32 %v1172, 1.442695
  %v1228 = vpow.pop %v1227
  %v1229 = vmul.f32 %v1173, 1.442695
  %v1230 = vpow.pop %v1229
  %v1231 = vmul.f32 %v1174, 1.442695
  %v1232 = vpow.pop %v1231
  %v1233 = vmul.f32 %v1175, 1.442695
  %v1234 = vpow.pop %v1233
  %v1235 = vmul.f32 %v1176, 1.442695
  %v1236 = vpow.pop %v1235
  %v1237 = vmul.f32 %v1177, 1.442695
  %v1238 = vpow.pop %v1237
  %v1239 = vmul.f32 %v1178, 1.442695
  %v1240 = vpow.pop %v1239
  %v1241 = vmul.f32 %v1179, 1.442695
  %v1242 = vpow.pop %v1241
  %v1243 = vmul.f32 %v1180, 1.442695
  %v1244 = vpow.pop %v1243
  %1245 = vadd.xlane.f32.xlu0 %v1182
  %v1246 = vpop.xlane.xlu0 %1245
  %1247 = vadd.xlane.f32.xlu0 %v1184
  %v1248 = vpop.xlane.xlu0 %1247
  %1249 = vadd.xlane.f32.xlu0 %v1186
  %v1250 = vpop.xlane.xlu0 %1249
  %1251 = vadd.xlane.f32.xlu0 %v1188
  %v1252 = vpop.xlane.xlu0 %1251
  %1253 = vadd.xlane.f32.xlu0 %v1190
  %v1254 = vpop.xlane.xlu0 %1253
  %1255 = vadd.xlane.f32.xlu0 %v1192
  %v1256 = vpop.xlane.xlu0 %1255
  %1257 = vadd.xlane.f32.xlu0 %v1194
  %v1258 = vpop.xlane.xlu0 %1257
  %1259 = vadd.xlane.f32.xlu0 %v1196
  %v1260 = vpop.xlane.xlu0 %1259
  %1261 = vadd.xlane.f32.xlu0 %v1198
  %v1262 = vpop.xlane.xlu0 %1261
  %1263 = vadd.xlane.f32.xlu0 %v1200
  %v1264 = vpop.xlane.xlu0 %1263
  %1265 = vadd.xlane.f32.xlu0 %v1202
  %v1266 = vpop.xlane.xlu0 %1265
  %1267 = vadd.xlane.f32.xlu0 %v1204
  %v1268 = vpop.xlane.xlu0 %1267
  %1269 = vadd.xlane.f32.xlu0 %v1206
  %v1270 = vpop.xlane.xlu0 %1269
  %1271 = vadd.xlane.f32.xlu0 %v1208
  %v1272 = vpop.xlane.xlu0 %1271
  %1273 = vadd.xlane.f32.xlu0 %v1210
  %v1274 = vpop.xlane.xlu0 %1273
  %1275 = vadd.xlane.f32.xlu0 %v1212
  %v1276 = vpop.xlane.xlu0 %1275
  %1277 = vadd.xlane.f32.xlu0 %v1214
  %v1278 = vpop.xlane.xlu0 %1277
  %1279 = vadd.xlane.f32.xlu0 %v1216
  %v1280 = vpop.xlane.xlu0 %1279
  %1281 = vadd.xlane.f32.xlu0 %v1218
  %v1282 = vpop.xlane.xlu0 %1281
  %1283 = vadd.xlane.f32.xlu0 %v1220
  %v1284 = vpop.xlane.xlu0 %1283
  %1285 = vadd.xlane.f32.xlu0 %v1222
  %v1286 = vpop.xlane.xlu0 %1285
  %1287 = vadd.xlane.f32.xlu0 %v1224
  %v1288 = vpop.xlane.xlu0 %1287
  %1289 = vadd.xlane.f32.xlu0 %v1226
  %v1290 = vpop.xlane.xlu0 %1289
  %1291 = vadd.xlane.f32.xlu0 %v1228
  %v1292 = vpop.xlane.xlu0 %1291
  %1293 = vadd.xlane.f32.xlu0 %v1230
  %v1294 = vpop.xlane.xlu0 %1293
  %1295 = vadd.xlane.f32.xlu0 %v1232
  %v1296 = vpop.xlane.xlu0 %1295
  %1297 = vadd.xlane.f32.xlu0 %v1234
  %v1298 = vpop.xlane.xlu0 %1297
  %1299 = vadd.xlane.f32.xlu0 %v1236
  %v1300 = vpop.xlane.xlu0 %1299
  %1301 = vadd.xlane.f32.xlu0 %v1238
  %v1302 = vpop.xlane.xlu0 %1301
  %1303 = vadd.xlane.f32.xlu0 %v1240
  %v1304 = vpop.xlane.xlu0 %1303
  %1305 = vadd.xlane.f32.xlu0 %v1242
  %v1306 = vpop.xlane.xlu0 %1305
  %1307 = vadd.xlane.f32.xlu0 %v1244
  %v1308 = vpop.xlane.xlu0 %1307
  %v1309 = vlog2.pop %v1246
  %v1310 = vmul.f32 %v1309, 0.6931472
  %v1311 = vlog2.pop %v1248
  %v1312 = vmul.f32 %v1311, 0.6931472
  %v1313 = vlog2.pop %v1250
  %v1314 = vmul.f32 %v1313, 0.6931472
  %v1315 = vlog2.pop %v1252
  %v1316 = vmul.f32 %v1315, 0.6931472
  %v1317 = vlog2.pop %v1254
  %v1318 = vmul.f32 %v1317, 0.6931472
  %v1319 = vlog2.pop %v1256
  %v1320 = vmul.f32 %v1319, 0.6931472
  %v1321 = vlog2.pop %v1258
  %v1322 = vmul.f32 %v1321, 0.6931472
  %v1323 = vlog2.pop %v1260
  %v1324 = vmul.f32 %v1323, 0.6931472
  %v1325 = vlog2.pop %v1262
  %v1326 = vmul.f32 %v1325, 0.6931472
  %v1327 = vlog2.pop %v1264
  %v1328 = vmul.f32 %v1327, 0.6931472
  %v1329 = vlog2.pop %v1266
  %v1330 = vmul.f32 %v1329, 0.6931472
  %v1331 = vlog2.pop %v1268
  %v1332 = vmul.f32 %v1331, 0.6931472
  %v1333 = vlog2.pop %v1270
  %v1334 = vmul.f32 %v1333, 0.6931472
  %v1335 = vlog2.pop %v1272
  %v1336 = vmul.f32 %v1335, 0.6931472
  %v1337 = vlog2.pop %v1274
  %v1338 = vmul.f32 %v1337, 0.6931472
  %v1339 = vlog2.pop %v1276
  %v1340 = vmul.f32 %v1339, 0.6931472
  %v1341 = vlog2.pop %v1278
  %v1342 = vmul.f32 %v1341, 0.6931472
  %v1343 = vlog2.pop %v1280
  %v1344 = vmul.f32 %v1343, 0.6931472
  %v1345 = vlog2.pop %v1282
  %v1346 = vmul.f32 %v1345, 0.6931472
  %v1347 = vlog2.pop %v1284
  %v1348 = vmul.f32 %v1347, 0.6931472
  %v1349 = vlog2.pop %v1286
  %v1350 = vmul.f32 %v1349, 0.6931472
  %v1351 = vlog2.pop %v1288
  %v1352 = vmul.f32 %v1351, 0.6931472
  %v1353 = vlog2.pop %v1290
  %v1354 = vmul.f32 %v1353, 0.6931472
  %v1355 = vlog2.pop %v1292
  %v1356 = vmul.f32 %v1355, 0.6931472
  %v1357 = vlog2.pop %v1294
  %v1358 = vmul.f32 %v1357, 0.6931472
  %v1359 = vlog2.pop %v1296
  %v1360 = vmul.f32 %v1359, 0.6931472
  %v1361 = vlog2.pop %v1298
  %v1362 = vmul.f32 %v1361, 0.6931472
  %v1363 = vlog2.pop %v1300
  %v1364 = vmul.f32 %v1363, 0.6931472
  %v1365 = vlog2.pop %v1302
  %v1366 = vmul.f32 %v1365, 0.6931472
  %v1367 = vlog2.pop %v1304
  %v1368 = vmul.f32 %v1367, 0.6931472
  %v1369 = vlog2.pop %v1306
  %v1370 = vmul.f32 %v1369, 0.6931472
  %v1371 = vlog2.pop %v1308
  %v1372 = vmul.f32 %v1371, 0.6931472
  %v1373 = vsub.f32 %v1149, %v1310
  %v1374 = vsub.f32 %v1150, %v1312
  %v1375 = vsub.f32 %v1151, %v1314
  %v1376 = vsub.f32 %v1152, %v1316
  %v1377 = vsub.f32 %v1153, %v1318
  %v1378 = vsub.f32 %v1154, %v1320
  %v1379 = vsub.f32 %v1155, %v1322
  %v1380 = vsub.f32 %v1156, %v1324
  %v1381 = vsub.f32 %v1157, %v1326
  %v1382 = vsub.f32 %v1158, %v1328
  %v1383 = vsub.f32 %v1159, %v1330
  %v1384 = vsub.f32 %v1160, %v1332
  %v1385 = vsub.f32 %v1161, %v1334
  %v1386 = vsub.f32 %v1162, %v1336
  %v1387 = vsub.f32 %v1163, %v1338
  %v1388 = vsub.f32 %v1164, %v1340
  %v1389 = vsub.f32 %v1165, %v1342
  %v1390 = vsub.f32 %v1166, %v1344
  %v1391 = vsub.f32 %v1167, %v1346
  %v1392 = vsub.f32 %v1168, %v1348
  %v1393 = vsub.f32 %v1169, %v1350
  %v1394 = vsub.f32 %v1170, %v1352
  %v1395 = vsub.f32 %v1171, %v1354
  %v1396 = vsub.f32 %v1172, %v1356
  %v1397 = vsub.f32 %v1173, %v1358
  %v1398 = vsub.f32 %v1174, %v1360
  %v1399 = vsub.f32 %v1175, %v1362
  %v1400 = vsub.f32 %v1176, %v1364
  %v1401 = vsub.f32 %v1177, %v1366
  %v1402 = vsub.f32 %v1178, %v1368
  %v1403 = vsub.f32 %v1179, %v1370
  %v1404 = vsub.f32 %v1180, %v1372
  %1405 = vst [vmem:[%s3] sm:$0xff] %v1373
  %1406 = vst [vmem:[%s3 + $0x8] sm:$0xff] %v1374
  %1407 = vst [vmem:[%s3 + $0x10] sm:$0xff] %v1375
  %1408 = vst [vmem:[%s3 + $0x18] sm:$0xff] %v1376
  %1409 = vst [vmem:[%s3 + $0x20] sm:$0xff] %v1377
  %1410 = vst [vmem:[%s3 + $0x28] sm:$0xff] %v1378
  %1411 = vst [vmem:[%s3 + $0x30] sm:$0xff] %v1379
  %1412 = vst [vmem:[%s3 + $0x38] sm:$0xff] %v1380
  %1413 = vst [vmem:[%s3 + $0x40] sm:$0xff] %v1381
  %1414 = vst [vmem:[%s3 + $0x48] sm:$0xff] %v1382
  %1415 = vst [vmem:[%s3 + $0x50] sm:$0xff] %v1383
  %1416 = vst [vmem:[%s3 + $0x58] sm:$0xff] %v1384
  %1417 = vst [vmem:[%s3 + $0x60] sm:$0xff] %v1385
  %1418 = vst [vmem:[%s3 + $0x68] sm:$0xff] %v1386
  %1419 = vst [vmem:[%s3 + $0x70] sm:$0xff] %v1387
  %1420 = vst [vmem:[%s3 + $0x78] sm:$0xff] %v1388
  %1421 = vst [vmem:[%s3 + $0x80] sm:$0xff] %v1389
  %1422 = vst [vmem:[%s3 + $0x88] sm:$0xff] %v1390
  %1423 = vst [vmem:[%s3 + $0x90] sm:$0xff] %v1391
  %1424 = vst [vmem:[%s3 + $0x98] sm:$0xff] %v1392
  %1425 = vst [vmem:[%s3 + $0xa0] sm:$0xff] %v1393
  %1426 = vst [vmem:[%s3 + $0xa8] sm:$0xff] %v1394
  %1427 = vst [vmem:[%s3 + $0xb0] sm:$0xff] %v1395
  %1428 = vst [vmem:[%s3 + $0xb8] sm:$0xff] %v1396
  %1429 = vst [vmem:[%s3 + $0xc0] sm:$0xff] %v1397
  %1430 = vst [vmem:[%s3 + $0xc8] sm:$0xff] %v1398
  %1431 = vst [vmem:[%s3 + $0xd0] sm:$0xff] %v1399
  %1432 = vst [vmem:[%s3 + $0xd8] sm:$0xff] %v1400
  %1433 = vst [vmem:[%s3 + $0xe0] sm:$0xff] %v1401
  %1434 = vst [vmem:[%s3 + $0xe8] sm:$0xff] %v1402
  %1435 = vst [vmem:[%s3 + $0xf0] sm:$0xff] %v1403
  %1436 = vst [vmem:[%s3 + $0xf8] sm:$0xff] %v1404
  // Predicated region
  $region14: #{cbow_forward_batched.1} parent=0 // pred_check
    _
  $region15: #{cbow_forward_batched.1} parent=0 // pred_check_branch
    %1438 = sbr.rel (0) target = $region17
  $region16: #{cbow_forward_batched.1} parent=0 // pred_region
    _
  $region17: #{cbow_forward_batched.1} parent=0 // pred_fallthru
    _
  // Predicated region
  $region18: #{cbow_forward_batched.1} parent=0 // pred_check
    _
  $region19: #{cbow_forward_batched.1} parent=0 // pred_check_branch
    %1440 = sbr.rel (0) target = $region21
  $region20: #{cbow_forward_batched.1} parent=0 // pred_region
    _
  $region21: #{cbow_forward_batched.1} parent=0 // pred_fallthru
    _

</llo_original>
